<compile_context>
chip_gen: v7x
topology: tpu7x:2x2x1
jax: 0.10.0
libtpu: 0.0.40
codegen_flags: <defaults>
</compile_context>

<pallas_src>
import functools

import jax
import jax.numpy as jnp
from jax import lax
from jax.experimental import pallas as pl
from jax.experimental.pallas import tpu as pltpu


# ----------------------------------------------------------------------------------- #
# Pass 1: per-batch sum(x) and x-gram (streaming, HBM-bound).
# ----------------------------------------------------------------------------------- #
def _stats_kernel(x_ref, sumx_ref, gx_ref, *, compute_dtype):
    p = pl.program_id(1)

    @pl.when(p == 0)
    def _init():
        sumx_ref[...] = jnp.zeros_like(sumx_ref)
        gx_ref[...] = jnp.zeros_like(gx_ref)

    x = x_ref[0]                                                    # (Cin, TP)
    # Lane-padded pixels are zero, so they contribute nothing to either accumulator.
    sumx_ref[0] += jnp.sum(x.astype(jnp.float32), axis=1, keepdims=True)
    xm = x.astype(compute_dtype)
    gx_ref[0] += lax.dot_general(xm, xm, (((1,), (1,)), ((), ())),
                                 preferred_element_type=jnp.float32)   # (Cin, Cin)


# ----------------------------------------------------------------------------------- #
# Pass 2: conv + BN + ReLU + per-batch gram of (act + 1e-3).
# ----------------------------------------------------------------------------------- #
def _apply_kernel(x_ref, w_ref, mean_ref, inv_std_ref, act_ref, gram_ref, *,
                  compute_dtype, tp, p_valid):
    p = pl.program_id(1)

    # 1x1 conv == per-pixel channel matmul on the MXU: (Cout, Cin) @ (Cin, TP).
    # (bias omitted: cancelled exactly by the training-mode BN mean subtraction)
    y = jnp.dot(w_ref[...], x_ref[0].astype(compute_dtype),
                preferred_element_type=jnp.float32)                 # (Cout, TP) f32

    act = jnp.maximum((y - mean_ref[...]) * inv_std_ref[...], 0.0)
    act_ref[0] = act.astype(act_ref.dtype)                          # lane-dense store

    t = act + 0.001
    if p_valid is not None:
        # P was lane-padded; keep padded pixels out of the grouping-loss gram.
        lane = lax.broadcasted_iota(jnp.int32, (1, tp), 1)
        t = jnp.where(p * tp + lane < p_valid, t, 0.0)

    @pl.when(p == 0)
    def _reset_batch_acc():
        gram_ref[...] = jnp.zeros_like(gram_ref)

    tm = t.astype(compute_dtype)
    gram_ref[0] += lax.dot_general(tm, tm, (((1,), (1,)), ((), ())),
                                   preferred_element_type=jnp.float32)  # (Cout, Cout)


# ----------------------------------------------------------------------------------- #
# Tiling helpers (generation-aware).
# ----------------------------------------------------------------------------------- #
def _round_up(x: int, m: int) -> int:
    return (x + m - 1) // m * m


def _vmem_budget_bytes() -> int:
    """~75% of this generation's VMEM (v5e/v6e: 128 MiB, v7x: 64 MiB per TC)."""
    cap = 64 * 1024 * 1024                      # conservative default (v7x per-TC)
    try:
        cap = int(getattr(pltpu.get_tpu_info(), "vmem_capacity_bytes", cap))
    except Exception:
        cap = 64 * 1024 * 1024
    return (cap * 3) // 4


def _pick_pixel_tile(p_pad, cin, cout, x_itemsize, act_itemsize, w_itemsize, budget):
    """Largest lane-aligned tile (multiple of 128, <=4096) dividing p_pad whose
    double-buffered apply-pass blocks fit inside the VMEM budget."""
    q = p_pad // 128
    fixed = (2 * cout * cout * 4            # per-batch gram out block (double-buffered)
             + 2 * cout * cin * w_itemsize  # resident weight
             + 4 * cout * 4)                # mean / inv_std
    best = 128
    for d in range(1, q + 1):
        if q % d:
            continue
        tp = 128 * d
        if tp > 4096:
            break
        per_tile = 2 * cin * tp * x_itemsize + 2 * cout * tp * act_itemsize + fixed
        if per_tile <= budget:
            best = tp
    return best


# ----------------------------------------------------------------------------------- #
# Wrapper
# ----------------------------------------------------------------------------------- #
def channel_grouping_forward(x_nchw, weight_oi, bias_o, n_groups, *,
                             mxu_dtype=None, bn_eps=1e-5):
    """Returns (matrix_act in NCHW, loss vector of shape (B,)) like the torch module
    (matrix_act is the return value; loss is the module's `self.loss` side value)."""
    del bias_o  # cancelled by training-mode BatchNorm mean subtraction (gamma=1, beta=0)
    B, Cin, H, W = x_nchw.shape
    Cout, Cin_w = weight_oi.shape
    assert Cin_w == Cin
    assert H == W, "module assumes square spatial dims (it uses w*w)"
    assert Cout % n_groups == 0
    P = H * W

    x_dtype = jnp.dtype(x_nchw.dtype)
    act_dtype = x_dtype                      # bf16 input => bf16 act (halves writeback)
    if mxu_dtype is None:
        mxu_dtype = jnp.bfloat16 if x_dtype == jnp.bfloat16 else jnp.float32
    compute_dtype = jnp.dtype(mxu_dtype)

    # Pure reshape (no transpose, no wrapper-side dtype cast): NCHW -> (B, Cin, P).
    x = x_nchw.reshape(B, Cin, P)
    P_pad = _round_up(P, 128)
    if P_pad != P:
        x = jnp.pad(x, ((0, 0), (0, 0), (0, P_pad - P)))
    p_valid = P if P_pad != P else None

    budget = _vmem_budget_bytes()
    TP = _pick_pixel_tile(P_pad, Cin, Cout, x_dtype.itemsize, jnp.dtype(act_dtype).itemsize,
                          compute_dtype.itemsize, budget)
    NP = P_pad // TP

    w_c = weight_oi.astype(compute_dtype)    # tiny; cast once here
    params = pltpu.CompilerParams(
        dimension_semantics=("parallel", "arbitrary"),   # batch-parallel (v7x 2 TCs)
        vmem_limit_bytes=budget,
    )

    # ---- pass 1: streaming batch stats of x ------------------------------------- #
    sumx_b, gx_b = pl.pallas_call(
        functools.partial(_stats_kernel, compute_dtype=compute_dtype),
        grid=(B, NP),
        in_specs=[pl.BlockSpec((1, Cin, TP), lambda b, p: (b, 0, p))],
        out_specs=(
            pl.BlockSpec((1, Cin, 1), lambda b, p: (b, 0, 0)),
            pl.BlockSpec((1, Cin, Cin), lambda b, p: (b, 0, 0)),
        ),
        out_shape=(
            jax.ShapeDtypeStruct((B, Cin, 1), jnp.float32),
            jax.ShapeDtypeStruct((B, Cin, Cin), jnp.float32),
        ),
        compiler_params=params,
    )(x)

    # Recover BatchNorm batch stats of y = W @ x (biased variance, training mode).
    # NOTE: one-pass E[y^2]-E[y]^2 (clamped); loses precision vs a centered form when
    # |mean| >> std — acceptable here, guarded by the clamp.
    n_total = float(B * P)
    w32 = weight_oi.astype(jnp.float32)
    sum_x = jnp.sum(sumx_b, axis=0)                                 # (Cin, 1)
    gx = jnp.sum(gx_b, axis=0)                                      # (Cin, Cin)
    mean = (w32 @ sum_x) / n_total                                  # (Cout, 1)
    e_y2 = jnp.sum((w32 @ gx) * w32, axis=1, keepdims=True) / n_total
    var = jnp.maximum(e_y2 - mean * mean, 0.0)
    inv_std = lax.rsqrt(var + bn_eps)                               # (Cout, 1)

    # ---- pass 2: conv + BN + ReLU + per-batch gram ------------------------------- #
    act_bcp, gram_b = pl.pallas_call(
        functools.partial(_apply_kernel, compute_dtype=compute_dtype, tp=TP,
                          p_valid=p_valid),
        grid=(B, NP),
        in_specs=[
            pl.BlockSpec((1, Cin, TP), lambda b, p: (b, 0, p)),
            pl.BlockSpec((Cout, Cin), lambda b, p: (0, 0)),
            pl.BlockSpec((Cout, 1), lambda b, p: (0, 0)),
            pl.BlockSpec((Cout, 1), lambda b, p: (0, 0)),
        ],
        out_specs=(
            pl.BlockSpec((1, Cout, TP), lambda b, p: (b, 0, p)),
            pl.BlockSpec((1, Cout, Cout), lambda b, p: (b, 0, 0)),
        ),
        out_shape=(
            jax.ShapeDtypeStruct((B, Cout, P_pad), act_dtype),
            jax.ShapeDtypeStruct((B, Cout, Cout), jnp.float32),
        ),
        compiler_params=params,
    )(x, w_c, mean, inv_std)

    # ---- grouping loss: tiny O(B*Cout^2) post-processing (plain XLA) ------------- #
    # Per-(b,c) squared norms are just diag(gram); F.normalize clamps the norm at 1e-12.
    n2 = jnp.diagonal(gram_b, axis1=1, axis2=2)                     # (B, Cout)
    inv_d = 1.0 / jnp.maximum(jnp.sqrt(n2), 1e-12)
    # D @ G_b @ D via two broadcast scalings (no O(Cout^3) matmul), summed over batch.
    co = jnp.sum(gram_b * inv_d[:, :, None] * inv_d[:, None, :], axis=0) / float(B)

    # Ground-truth group matrix: eye(n_groups) pixel-shuffled == block-diagonal ones.
    r = Cout // n_groups
    idx = jnp.arange(Cout)
    gt = (idx[:, None] // r == idx[None, :] // r).astype(jnp.float32)

    diff = co - gt
    loss_single = jnp.sum(diff * diff) * 0.001 / ((Cout / 512.0) ** 2)
    loss = jnp.broadcast_to(loss_single, (B,))                      # loss_single.repeat(b)

    if P_pad != P:
        act_bcp = act_bcp[:, :, :P]
    matrix_act = act_bcp.reshape(B, Cout, H, W)                     # pure reshape to NCHW
    return matrix_act, loss


# ----------------------------------------------------------------------------------- #
# Plain-JAX reference of the torch forward (for a numerical sanity check).
# ----------------------------------------------------------------------------------- #
def _reference_forward(x, weight, bias, n_groups, eps=1e-5):
    B, Cin, H, W = x.shape
    Cout = weight.shape[0]
    y = jnp.einsum("oc,bchw->bohw", weight, x) + bias[None, :, None, None]
    mean = y.mean(axis=(0, 2, 3), keepdims=True)
    var = ((y - mean) ** 2).mean(axis=(0, 2, 3), keepdims=True)     # biased (training)
    act = jnp.maximum((y - mean) / jnp.sqrt(var + eps), 0.0)
    t = (act + 0.001).reshape(B * Cout, H * W)
    t = t / jnp.maximum(jnp.linalg.norm(t, axis=1, keepdims=True), 1e-12)
    t = t.reshape(B, Cout, H * W).transpose(1, 0, 2).reshape(Cout, B * H * W)
    co = (t @ t.T) / B
    r = Cout // n_groups
    idx = jnp.arange(Cout)
    gt = (idx[:, None] // r == idx[None, :] // r).astype(jnp.float32)
    loss_single = jnp.sum((co - gt) ** 2) * 0.001 / ((Cout / 512.0) ** 2)
    return act, jnp.broadcast_to(loss_single, (B,))


if __name__ == "__main__":
    B, Cin, H, W = 2, 4, 16, 16
    Cout, n_groups = 8, 2

    key = jax.random.PRNGKey(0)
    x = jax.random.normal(key, (B, Cin, H, W), dtype=jnp.float32)

    # Deterministic params per the module's __init__:
    #   Conv2d(Cin, Cout, 1): weight = 1.0 (squeezed to (Cout, Cin)), bias = 0.1
    #   BatchNorm2d defaults (gamma=1, beta=0, eps=1e-5, training-mode batch stats)
    weight = jnp.ones((Cout, Cin), dtype=jnp.float32)
    bias = jnp.full((Cout,), 0.1, dtype=jnp.float32)

    fwd = jax.jit(channel_grouping_forward, static_argnums=(3,))
    matrix_act, loss = fwd(x, weight, bias, n_groups)
    jax.block_until_ready((matrix_act, loss))

    assert matrix_act.shape == (B, Cout, H, W)
    assert matrix_act.dtype == jnp.float32
    assert loss.shape == (B,)

    # Numerical check against a plain-JAX reference of the torch forward (f32 path).
    ref_act, ref_loss = _reference_forward(x, weight, bias, n_groups)
    assert jnp.allclose(matrix_act, ref_act, atol=2e-3, rtol=2e-3)
    assert jnp.allclose(loss, ref_loss, atol=1e-3, rtol=2e-3)

    # Exercise the bf16 MXU fast path (shapes / finiteness only; looser numerics).
    fwd_bf16 = jax.jit(
        functools.partial(channel_grouping_forward, mxu_dtype=jnp.bfloat16),
        static_argnums=(3,))
    act_bf16, loss_bf16 = fwd_bf16(x, weight, bias, n_groups)
    jax.block_until_ready((act_bf16, loss_bf16))
    assert act_bf16.shape == (B, Cout, H, W)
    assert bool(jnp.all(jnp.isfinite(loss_bf16)))

    print("KERNEL_OK")
</pallas_src>

<mosaic_0001>
module attributes {stable_mosaic.version = 11 : i64} {
  func.func @_stats_kernel(%arg0: i32, %arg1: i32, %arg2: memref<1x4x256xf32, #tpu.memory_space<vmem>>, %arg3: memref<1x4x1xf32, #tpu.memory_space<vmem>>, %arg4: memref<1x4x4xf32, #tpu.memory_space<vmem>>) attributes {dimension_semantics = [#tpu.dimension_semantics<parallel>, #tpu.dimension_semantics<arbitrary>], iteration_bounds = array<i64: 2, 1>, scalar_prefetch = 0 : i64, scratch_operands = 0 : i64, tpu.core_type = #tpu.core_type<tc>, window_params = [{transform_indices = @transform_0, window_bounds = array<i64: 1, 4, 256>}, {transform_indices = @transform_1, window_bounds = array<i64: 1, 4, 1>}, {transform_indices = @transform_2, window_bounds = array<i64: 1, 4, 4>}]} {
    %c0_i32 = arith.constant 0 : i32
    %0 = arith.cmpi eq, %arg1, %c0_i32 : i32
    %1 = arith.extui %0 : i1 to i32
    %c0_i32_0 = arith.constant 0 : i32
    %2 = arith.cmpi ne, %1, %c0_i32_0 : i32
    scf.if %2 {
      %cst_16 = arith.constant 0.000000e+00 : f32
      %20 = vector.broadcast %cst_16 : f32 to vector<1x4x1xf32>
      %c0_17 = arith.constant 0 : index
      %c0_18 = arith.constant 0 : index
      %c0_19 = arith.constant 0 : index
      %21 = vector.load %arg3[%c0_17, %c0_18, %c0_19] : memref<1x4x1xf32, #tpu.memory_space<vmem>>, vector<1x4x1xf32>
      tpu.vector_store %arg3[%c0_17, %c0_18, %c0_19], %20 {strides = array<i32>} : memref<1x4x1xf32, #tpu.memory_space<vmem>>, vector<1x4x1xf32>,
      %cst_20 = arith.constant 0.000000e+00 : f32
      %22 = vector.broadcast %cst_20 : f32 to vector<1x4x4xf32>
      %c0_21 = arith.constant 0 : index
      %c0_22 = arith.constant 0 : index
      %c0_23 = arith.constant 0 : index
      %23 = vector.load %arg4[%c0_21, %c0_22, %c0_23] : memref<1x4x4xf32, #tpu.memory_space<vmem>>, vector<1x4x4xf32>
      tpu.vector_store %arg4[%c0_21, %c0_22, %c0_23], %22 {strides = array<i32>} : memref<1x4x4xf32, #tpu.memory_space<vmem>>, vector<1x4x4xf32>,
    } else {
    }
    %c0 = arith.constant 0 : index
    %c0_1 = arith.constant 0 : index
    %c0_2 = arith.constant 0 : index
    %3 = vector.load %arg2[%c0, %c0_1, %c0_2] : memref<1x4x256xf32, #tpu.memory_space<vmem>>, vector<1x4x256xf32>
    %4 = vector.shape_cast %3 : vector<1x4x256xf32> to vector<4x256xf32>
    %c0_3 = arith.constant 0 : index
    %c0_4 = arith.constant 0 : index
    %c0_5 = arith.constant 0 : index
    %5 = vector.load %arg3[%c0_3, %c0_4, %c0_5] : memref<1x4x1xf32, #tpu.memory_space<vmem>>, vector<1x4x1xf32>
    %6 = vector.shape_cast %5 : vector<1x4x1xf32> to vector<4x1xf32>
    %cst = arith.constant dense<0.000000e+00> : vector<4xf32>
    %7 = vector.multi_reduction <add>, %4, %cst [1] : vector<4x256xf32> to vector<4xf32>
    %8 = vector.shape_cast %7 : vector<4xf32> to vector<4x1xf32>
    %9 = arith.addf %6, %8 : vector<4x1xf32>
    %c0_6 = arith.constant 0 : index
    %c0_7 = arith.constant 0 : index
    %c0_8 = arith.constant 0 : index
    %10 = vector.load %arg3[%c0_6, %c0_7, %c0_8] : memref<1x4x1xf32, #tpu.memory_space<vmem>>, vector<1x4x1xf32>
    %11 = vector.shape_cast %10 : vector<1x4x1xf32> to vector<4x1xf32>
    %12 = vector.shape_cast %9 : vector<4x1xf32> to vector<1x4x1xf32>
    tpu.vector_store %arg3[%c0_6, %c0_7, %c0_8], %12 {strides = array<i32>} : memref<1x4x1xf32, #tpu.memory_space<vmem>>, vector<1x4x1xf32>,
    %c0_9 = arith.constant 0 : index
    %c0_10 = arith.constant 0 : index
    %c0_11 = arith.constant 0 : index
    %13 = vector.load %arg4[%c0_9, %c0_10, %c0_11] : memref<1x4x4xf32, #tpu.memory_space<vmem>>, vector<1x4x4xf32>
    %14 = vector.shape_cast %13 : vector<1x4x4xf32> to vector<4x4xf32>
    %cst_12 = arith.constant dense<0.000000e+00> : vector<4x4xf32>
    %15 = tpu.matmul %4, %4, %cst_12 {dimension_numbers = #tpu.dot_dimension_numbers<[1], [1], [0], [0], [0, 0, 1, 0], [], []>} : vector<4x256xf32>, vector<4x256xf32>, vector<4x4xf32> -> vector<4x4xf32>
    %16 = arith.addf %14, %15 : vector<4x4xf32>
    %c0_13 = arith.constant 0 : index
    %c0_14 = arith.constant 0 : index
    %c0_15 = arith.constant 0 : index
    %17 = vector.load %arg4[%c0_13, %c0_14, %c0_15] : memref<1x4x4xf32, #tpu.memory_space<vmem>>, vector<1x4x4xf32>
    %18 = vector.shape_cast %17 : vector<1x4x4xf32> to vector<4x4xf32>
    %19 = vector.shape_cast %16 : vector<4x4xf32> to vector<1x4x4xf32>
    tpu.vector_store %arg4[%c0_13, %c0_14, %c0_15], %19 {strides = array<i32>} : memref<1x4x4xf32, #tpu.memory_space<vmem>>, vector<1x4x4xf32>,
    return
  }
  func.func @transform_0(%arg0: i32, %arg1: i32) -> (i32, i32, i32) {
    %c0_i32 = arith.constant 0 : i32
    %c0_i32_0 = arith.constant 0 : i32
    return %arg0, %c0_i32, %arg1 : i32, i32, i32
  }
  func.func @transform_1(%arg0: i32, %arg1: i32) -> (i32, i32, i32) {
    %c0_i32 = arith.constant 0 : i32
    %c0_i32_0 = arith.constant 0 : i32
    %c0_i32_1 = arith.constant 0 : i32
    return %arg0, %c0_i32, %c0_i32_0 : i32, i32, i32
  }
  func.func @transform_2(%arg0: i32, %arg1: i32) -> (i32, i32, i32) {
    %c0_i32 = arith.constant 0 : i32
    %c0_i32_0 = arith.constant 0 : i32
    %c0_i32_1 = arith.constant 0 : i32
    return %arg0, %c0_i32, %c0_i32_0 : i32, i32, i32
  }
}

module attributes {stable_mosaic.version = 11 : i64} {
  func.func @_apply_kernel(%arg0: i32, %arg1: i32, %arg2: memref<1x4x256xf32, #tpu.memory_space<vmem>>, %arg3: memref<8x4xf32, #tpu.memory_space<vmem>>, %arg4: memref<8x1xf32, #tpu.memory_space<vmem>>, %arg5: memref<8x1xf32, #tpu.memory_space<vmem>>, %arg6: memref<1x8x256xf32, #tpu.memory_space<vmem>>, %arg7: memref<1x8x8xf32, #tpu.memory_space<vmem>>) attributes {dimension_semantics = [#tpu.dimension_semantics<parallel>, #tpu.dimension_semantics<arbitrary>], iteration_bounds = array<i64: 2, 1>, scalar_prefetch = 0 : i64, scratch_operands = 0 : i64, tpu.core_type = #tpu.core_type<tc>, window_params = [{transform_indices = @transform_0, window_bounds = array<i64: 1, 4, 256>}, {pipeline_mode = #tpu.pipeline_mode<synchronous>, transform_indices = @transform_1, window_bounds = array<i64: 8, 4>}, {pipeline_mode = #tpu.pipeline_mode<synchronous>, transform_indices = @transform_2, window_bounds = array<i64: 8, 1>}, {pipeline_mode = #tpu.pipeline_mode<synchronous>, transform_indices = @transform_3, window_bounds = array<i64: 8, 1>}, {transform_indices = @transform_4, window_bounds = array<i64: 1, 8, 256>}, {transform_indices = @transform_5, window_bounds = array<i64: 1, 8, 8>}]} {
    %c0 = arith.constant 0 : index
    %c0_0 = arith.constant 0 : index
    %0 = vector.load %arg3[%c0, %c0_0] : memref<8x4xf32, #tpu.memory_space<vmem>>, vector<8x4xf32>
    %c0_1 = arith.constant 0 : index
    %c0_2 = arith.constant 0 : index
    %c0_3 = arith.constant 0 : index
    %1 = vector.load %arg2[%c0_1, %c0_2, %c0_3] : memref<1x4x256xf32, #tpu.memory_space<vmem>>, vector<1x4x256xf32>
    %2 = vector.shape_cast %1 : vector<1x4x256xf32> to vector<4x256xf32>
    %cst = arith.constant dense<0.000000e+00> : vector<8x256xf32>
    %3 = tpu.matmul %0, %2, %cst {dimension_numbers = #tpu.dot_dimension_numbers<[1], [0], [0], [1], [0, 0, 1, 1], [], []>} : vector<8x4xf32>, vector<4x256xf32>, vector<8x256xf32> -> vector<8x256xf32>
    %c0_4 = arith.constant 0 : index
    %c0_5 = arith.constant 0 : index
    %4 = vector.load %arg4[%c0_4, %c0_5] : memref<8x1xf32, #tpu.memory_space<vmem>>, vector<8x1xf32>
    %5 = vector.broadcast %4 : vector<8x1xf32> to vector<8x256xf32>
    %6 = arith.subf %3, %5 : vector<8x256xf32>
    %c0_6 = arith.constant 0 : index
    %c0_7 = arith.constant 0 : index
    %7 = vector.load %arg5[%c0_6, %c0_7] : memref<8x1xf32, #tpu.memory_space<vmem>>, vector<8x1xf32>
    %8 = vector.broadcast %7 : vector<8x1xf32> to vector<8x256xf32>
    %9 = arith.mulf %6, %8 : vector<8x256xf32>
    %cst_8 = arith.constant 0.000000e+00 : f32
    %10 = vector.broadcast %cst_8 : f32 to vector<8x256xf32>
    %11 = arith.maximumf %9, %10 : vector<8x256xf32>
    %c0_9 = arith.constant 0 : index
    %c0_10 = arith.constant 0 : index
    %c0_11 = arith.constant 0 : index
    %12 = vector.load %arg6[%c0_9, %c0_10, %c0_11] : memref<1x8x256xf32, #tpu.memory_space<vmem>>, vector<1x8x256xf32>
    %13 = vector.shape_cast %12 : vector<1x8x256xf32> to vector<8x256xf32>
    %14 = vector.shape_cast %11 : vector<8x256xf32> to vector<1x8x256xf32>
    tpu.vector_store %arg6[%c0_9, %c0_10, %c0_11], %14 {strides = array<i32>} : memref<1x8x256xf32, #tpu.memory_space<vmem>>, vector<1x8x256xf32>,
    %cst_12 = arith.constant 1.000000e-03 : f32
    %15 = vector.broadcast %cst_12 : f32 to vector<8x256xf32>
    %16 = arith.addf %11, %15 : vector<8x256xf32>
    %c0_i32 = arith.constant 0 : i32
    %17 = arith.cmpi eq, %arg1, %c0_i32 : i32
    %18 = arith.extui %17 : i1 to i32
    %c0_i32_13 = arith.constant 0 : i32
    %19 = arith.cmpi ne, %18, %c0_i32_13 : i32
    scf.if %19 {
      %cst_21 = arith.constant 0.000000e+00 : f32
      %27 = vector.broadcast %cst_21 : f32 to vector<1x8x8xf32>
      %c0_22 = arith.constant 0 : index
      %c0_23 = arith.constant 0 : index
      %c0_24 = arith.constant 0 : index
      %28 = vector.load %arg7[%c0_22, %c0_23, %c0_24] : memref<1x8x8xf32, #tpu.memory_space<vmem>>, vector<1x8x8xf32>
      tpu.vector_store %arg7[%c0_22, %c0_23, %c0_24], %27 {strides = array<i32>} : memref<1x8x8xf32, #tpu.memory_space<vmem>>, vector<1x8x8xf32>,
    } else {
    }
    %c0_14 = arith.constant 0 : index
    %c0_15 = arith.constant 0 : index
    %c0_16 = arith.constant 0 : index
    %20 = vector.load %arg7[%c0_14, %c0_15, %c0_16] : memref<1x8x8xf32, #tpu.memory_space<vmem>>, vector<1x8x8xf32>
    %21 = vector.shape_cast %20 : vector<1x8x8xf32> to vector<8x8xf32>
    %cst_17 = arith.constant dense<0.000000e+00> : vector<8x8xf32>
    %22 = tpu.matmul %16, %16, %cst_17 {dimension_numbers = #tpu.dot_dimension_numbers<[1], [1], [0], [0], [0, 0, 1, 0], [], []>} : vector<8x256xf32>, vector<8x256xf32>, vector<8x8xf32> -> vector<8x8xf32>
    %23 = arith.addf %21, %22 : vector<8x8xf32>
    %c0_18 = arith.constant 0 : index
    %c0_19 = arith.constant 0 : index
    %c0_20 = arith.constant 0 : index
    %24 = vector.load %arg7[%c0_18, %c0_19, %c0_20] : memref<1x8x8xf32, #tpu.memory_space<vmem>>, vector<1x8x8xf32>
    %25 = vector.shape_cast %24 : vector<1x8x8xf32> to vector<8x8xf32>
    %26 = vector.shape_cast %23 : vector<8x8xf32> to vector<1x8x8xf32>
    tpu.vector_store %arg7[%c0_18, %c0_19, %c0_20], %26 {strides = array<i32>} : memref<1x8x8xf32, #tpu.memory_space<vmem>>, vector<1x8x8xf32>,
    return
  }
  func.func @transform_0(%arg0: i32, %arg1: i32) -> (i32, i32, i32) {
    %c0_i32 = arith.constant 0 : i32
    %c0_i32_0 = arith.constant 0 : i32
    return %arg0, %c0_i32, %arg1 : i32, i32, i32
  }
  func.func @transform_1(%arg0: i32, %arg1: i32) -> (i32, i32) {
    %c0_i32 = arith.constant 0 : i32
    %c0_i32_0 = arith.constant 0 : i32
    %c0_i32_1 = arith.constant 0 : i32
    return %c0_i32, %c0_i32_0 : i32, i32
  }
  func.func @transform_2(%arg0: i32, %arg1: i32) -> (i32, i32) {
    %c0_i32 = arith.constant 0 : i32
    %c0_i32_0 = arith.constant 0 : i32
    %c0_i32_1 = arith.constant 0 : i32
    return %c0_i32, %c0_i32_0 : i32, i32
  }
  func.func @transform_3(%arg0: i32, %arg1: i32) -> (i32, i32) {
    %c0_i32 = arith.constant 0 : i32
    %c0_i32_0 = arith.constant 0 : i32
    %c0_i32_1 = arith.constant 0 : i32
    return %c0_i32, %c0_i32_0 : i32, i32
  }
  func.func @transform_4(%arg0: i32, %arg1: i32) -> (i32, i32, i32) {
    %c0_i32 = arith.constant 0 : i32
    %c0_i32_0 = arith.constant 0 : i32
    return %arg0, %c0_i32, %arg1 : i32, i32, i32
  }
  func.func @transform_5(%arg0: i32, %arg1: i32) -> (i32, i32, i32) {
    %c0_i32 = arith.constant 0 : i32
    %c0_i32_0 = arith.constant 0 : i32
    %c0_i32_1 = arith.constant 0 : i32
    return %arg0, %c0_i32, %c0_i32_0 : i32, i32, i32
  }
}

</mosaic_0001>

<llo_original>
// kernel: channel_grouping_forward.2
$region0: #{channel_grouping_forward.2}
  #allocation0 [shape = 'u32[]', space=smem, size = 0x4, offset = 0x4, fixed_abs, tag = 'smem constant byte address 0x4 - core index']
  #allocation1 [shape = 'u32[144,128]{1,0:T(1,128)}', space=vmem, size = 0x12000, scoped, tag = 'internal scratch']
  %s0 = inlined_call_operand.vmem [shape: f32[2,4,256], index: 0, kind: input, shape index: {}]
  %s1 = inlined_call_operand.vmem [shape: f32[2,4,1], index: 1, kind: output, shape index: {0}]
  %s2 = inlined_call_operand.vmem [shape: f32[2,4,4], index: 2, kind: output, shape index: {1}]
  %3 = xla_tuple %s1, %s2
  %s4 = sld [smem:[#allocation0]]
  $region49: #{channel_grouping_forward.2} parent=0
    _
  %s6 = ssub.s32 1, %s4
  %s7 = scalar_select 0, %s6, %s4
  loop: start=0, step=1, limit=4
  $region2: #{channel_grouping_forward.2} parent=0 // loop_pre_header
    _
  $region3: #{channel_grouping_forward.2} parent=0 // loop_header
    %s9 = sphi 0, %s13
    %p10 = scmp.ge.s32.totalorder %s9, 4
    %s16 = sphi 0, %s28
    %s17 = sphi 0, %s24
    %s18 = sphi 0, %s16
    %s19 = sphi 0, %s17
    %s20 = sphi 0, %s18
    %s21 = sphi 0, %s19
    %s33 = sphi 0, %s35
    %s36 = sphi 0, %s33
    %s37 = sphi 0, %s36
    %s53 = sphi 0, %s37
    %s59 = sphi 0, %s61
    %s62 = sphi 0, %s59
    %s63 = sphi 0, %s62
    %s79 = sphi 0, %s63
    %s85 = sphi 0, %s87
    %s88 = sphi 0, %s85
    %s89 = sphi 0, %s88
    %s105 = sphi 0, %s89
  $region4: #{channel_grouping_forward.2} parent=0 // loop_header_branch
    %12 = sbr.rel (%p10) target = $region8
  $region5: #{channel_grouping_forward.2} parent=0 // loop_body
    %s14 = ssub.s32 %s9, 1
    %s15 = ssub.s32 %s9, 2
    %s22 = sadd.s32 1, %s17
    %p23 = scmp.ge.s32.totalorder %s22, 1
    %s24 = scalar_select %p23, 0, %s22
    %s25 = sadd.s32 1, %s16
    %s26 = scalar_select %p23, %s25, %s16
    %p27 = scmp.ge.s32.totalorder %s26, 2
    %s28 = scalar_select %p27, 0, %s26
    %s29 = ssub.s32 %s16, %s28
    %s30 = ssub.s32 %s17, %s24
    %s31 = sor.u32 %s29, %s30
    %p32 = scmp.eq.s32.totalorder %s31, 0
    %s34 = sadd.s32 %s33, 1
    %s35 = scalar_select %p32, %s33, %s34
    %p38 = pneg %p32
    %p39 = scmp.eq.s32.totalorder %s9, 1
    %p40 = por %p38, %p39
    %p41 = scmp.ne.s32.totalorder %s33, %s36
    %p42 = scmp.eq.s32.totalorder %s9, 0
    %p43 = por %p41, %p42
    %p44 = scmp.ne.s32.totalorder %s33, %s36
    %p45 = scmp.eq.s32.totalorder %s14, 1
    %p46 = por %p44, %p45
    %p47 = scmp.ne.s32.totalorder %s36, %s37
    %p48 = scmp.eq.s32.totalorder %s14, 0
    %p49 = por %p47, %p48
    %p50 = scmp.ne.s32.totalorder %s36, %s37
    %p51 = scmp.eq.s32.totalorder %s15, 1
    %p52 = por %p50, %p51
    %p54 = scmp.ne.s32.totalorder %s37, %s53
    %p55 = scmp.eq.s32.totalorder %s15, 0
    %p56 = por %p54, %p55
    %s57 = ssub.s32 %s16, %s28
    %p58 = scmp.eq.s32.totalorder %s57, 0
    %s60 = sadd.s32 %s59, 1
    %s61 = scalar_select %p58, %s59, %s60
    %p64 = pneg %p58
    %p65 = scmp.eq.s32.totalorder %s9, 1
    %p66 = por %p64, %p65
    %p67 = scmp.ne.s32.totalorder %s59, %s62
    %p68 = scmp.eq.s32.totalorder %s9, 0
    %p69 = por %p67, %p68
    %p70 = scmp.ne.s32.totalorder %s59, %s62
    %p71 = scmp.eq.s32.totalorder %s14, 1
    %p72 = por %p70, %p71
    %p73 = scmp.ne.s32.totalorder %s62, %s63
    %p74 = scmp.eq.s32.totalorder %s14, 0
    %p75 = por %p73, %p74
    %p76 = scmp.ne.s32.totalorder %s62, %s63
    %p77 = scmp.eq.s32.totalorder %s15, 1
    %p78 = por %p76, %p77
    %p80 = scmp.ne.s32.totalorder %s63, %s79
    %p81 = scmp.eq.s32.totalorder %s15, 0
    %p82 = por %p80, %p81
    %s83 = ssub.s32 %s16, %s28
    %p84 = scmp.eq.s32.totalorder %s83, 0
    %s86 = sadd.s32 %s85, 1
    %s87 = scalar_select %p84, %s85, %s86
    %p90 = pneg %p84
    %p91 = scmp.eq.s32.totalorder %s9, 1
    %p92 = por %p90, %p91
    %p93 = scmp.ne.s32.totalorder %s85, %s88
    %p94 = scmp.eq.s32.totalorder %s9, 0
    %p95 = por %p93, %p94
    %p96 = scmp.ne.s32.totalorder %s85, %s88
    %p97 = scmp.eq.s32.totalorder %s14, 1
    %p98 = por %p96, %p97
    %p99 = scmp.ne.s32.totalorder %s88, %s89
    %p100 = scmp.eq.s32.totalorder %s14, 0
    %p101 = por %p99, %p100
    %p102 = scmp.ne.s32.totalorder %s88, %s89
    %p103 = scmp.eq.s32.totalorder %s15, 1
    %p104 = por %p102, %p103
    %p106 = scmp.ne.s32.totalorder %s89, %s105
    %p107 = scmp.eq.s32.totalorder %s15, 0
    %p108 = por %p106, %p107
    %p109 = scmp.le.s32.totalorder 1, %s9
    %p110 = scmp.lt.s32.totalorder %s9, 3
    %p111 = pnand %p109, %p110
    %p112 = pneg %p111
    // Predicated region
    $region9: #{channel_grouping_forward.2} parent=5 // pred_check
      _
    $region10: #{channel_grouping_forward.2} parent=5 // pred_check_branch
      %114 = sbr.rel (%p111) target = $region12
    $region11: #{channel_grouping_forward.2} parent=5 // pred_region
      %s115 = ssub.s32 %s9, 1
    $region12: #{channel_grouping_forward.2} parent=5 // pred_fallthru
      _
    %p116 = scmp.lt.s32.totalorder %s9, 2
    // Predicated region
    $region13: #{channel_grouping_forward.2} parent=5 // pred_check
      %p117 = pneg %p116
    $region14: #{channel_grouping_forward.2} parent=5 // pred_check_branch
      %119 = sbr.rel (%p117) target = $region16
    $region15: #{channel_grouping_forward.2} parent=5 // pred_region
      // Predicated region
      $region17: #{channel_grouping_forward.2} parent=15 // pred_check
        %p120 = pneg %p43
      $region18: #{channel_grouping_forward.2} parent=15 // pred_check_branch
        %122 = sbr.rel (%p120) target = $region20
      $region19: #{channel_grouping_forward.2} parent=15 // pred_region
        %s123 = smul.u32 2, %s17
        %p124 = scmp.lt.s32.totalorder %s16, 1
        %s125 = scalar_select %p124, %s16, 1
        %p126 = scmp.lt.s32.totalorder %s123, 1
        %s127 = scalar_select %p126, %s123, 1
        %s128 = smul.addr %s125, 2
        %s129 = sadd.s32 %s127, %s128
        %s130 = smul.addr %s129, 4
        %s131 = scalar_lea.vmem %s0, %s130
        %s132 = smul.u32 2, %s17
      $region20: #{channel_grouping_forward.2} parent=15 // pred_fallthru
        _
    $region16: #{channel_grouping_forward.2} parent=5 // pred_fallthru
      _
    %p133 = scmp.le.s32.totalorder 1, %s9
    %p134 = scmp.lt.s32.totalorder %s9, 3
    %p135 = pnand %p133, %p134
    %p136 = pneg %p135
    // Predicated region
    $region21: #{channel_grouping_forward.2} parent=5 // pred_check
      _
    $region22: #{channel_grouping_forward.2} parent=5 // pred_check_branch
      %138 = sbr.rel (%p135) target = $region24
    $region23: #{channel_grouping_forward.2} parent=5 // pred_region
      %s139 = ssub.s32 %s9, 1
      %s140 = smul.u32 2, %s19
      %p141 = scmp.lt.s32.totalorder %s18, 1
      %s142 = scalar_select %p141, %s18, 1
      %p143 = scmp.lt.s32.totalorder %s140, 1
      %s144 = scalar_select %p143, %s140, 1
      %s145 = smul.addr %s142, 2
      %s146 = sadd.s32 %s144, %s145
      %s147 = smul.addr %s146, 4
      %s148 = scalar_lea.vmem %s0, %s147
      %p149 = pneg %p49
      %p150 = pneg %p46
      %p151 = pneg %p75
      %p152 = pneg %p72
      %p153 = scmp.lt.s32.totalorder %s18, 1
      %s154 = scalar_select %p153, %s18, 1
      %s155 = smul.addr %s154, 4
      %s156 = scalar_lea.vmem %s1, %s155
      %p157 = pneg %p101
      %p158 = pneg %p98
      %p159 = scmp.lt.s32.totalorder %s18, 1
      %s160 = scalar_select %p159, %s18, 1
      %s161 = smul.addr %s160, 4
      %s162 = scalar_lea.vmem %s2, %s161
      %s163 = smul.u32 2, %s19
      %p164 = scmp.lt.s32.totalorder %s18, 1
      %s165 = scalar_select %p164, %s18, 1
      %p166 = scmp.lt.s32.totalorder %s163, 1
      %s167 = scalar_select %p166, %s163, 1
      %s168 = smul.addr %s165, 2
      %s169 = sadd.s32 %s167, %s168
      %s170 = smul.addr %s169, 4
      %s171 = scalar_lea.vmem %s0, %s170
      %s172 = smul.u32 2, %s19
      %p173 = scmp.lt.s32.totalorder %s18, 1
      %s174 = scalar_select %p173, %s18, 1
      %s175 = smul.addr %s174, 4
      %s176 = scalar_lea.vmem %s1, %s175
      %p177 = scmp.lt.s32.totalorder %s18, 1
      %s178 = scalar_select %p177, %s18, 1
      %s179 = smul.addr %s178, 4
      %s180 = scalar_lea.vmem %s2, %s179
      %p181 = scmp.eq.s32.totalorder %s19, 0
      // Predicated region
      $region25: #{channel_grouping_forward.2} parent=23 // pred_check
        %p182 = pneg %p181
      $region26: #{channel_grouping_forward.2} parent=23 // pred_check_branch
        %184 = sbr.rel (%p182) target = $region28
      $region27: #{channel_grouping_forward.2} parent=23 // pred_region
        %vm185 = vcmask 3072
        %186 = vst.msk [vmem:[%s176] sm:$0xf] %vm185, 0.0
        %vm187 = vcmask 27648
        %188 = vst.msk [vmem:[%s180] sm:$0xf] %vm187, 0.0
      $region28: #{channel_grouping_forward.2} parent=23 // pred_fallthru
        _
      %v189 = vld [vmem:[%s171] sm:$0xff]
      %v190 = vld [vmem:[%s176] sm:$0xf]
      %v192 = vcombine.high %v189, %v189
      %vm194 = vcmask 1043456
      %v195 = vsel %vm194, %v189, 0.0
      %v196 = vsel %vm194, %v192, 0.0
      %v197 = vadd.f32 %v195, %v196
      %198 = vadd.xlane.f32.xlu0 %v197
      %v199 = vpop.xlane.xlu0 %198
      %v200 = vadd.f32 %v190, %v199
      %vm201 = vcmask 3072
      %202 = vst.msk [vmem:[%s176] sm:$0xf] %vm201, %v200
      %v203 = vld [vmem:[%s180] sm:$0xf]
      %204 = vmatprep.subr.mxu0 %v192
      %205 = vmatpush1.xpose.msra.mxu0 %v189
      %206 = vmatprep.subr.mxu0 0.0
      %207 = vmatpush1.xpose.msra.mxu0 0.0
      %208 = vmatprep.subr.mxu0 0.0
      %209 = vmatpush1.xpose.msra.mxu0 0.0
      %210 = vmatprep.subr.mxu0 0.0
      %211 = vmatpush1.xpose.msra.mxu0 0.0
      %212 = vmatprep.subr.mxu0 0.0
      %213 = vmatpush1.xpose.msra.mxu0 0.0
      %214 = vmatprep.subr.mxu0 0.0
      %215 = vmatpush1.xpose.msra.mxu0 0.0
      %216 = vmatprep.subr.mxu0 0.0
      %217 = vmatpush1.xpose.msra.mxu0 0.0
      %218 = vmatprep.subr.mxu0 0.0
      %219 = vmatpush1.xpose.msra.mxu0 0.0
      %220 = vmatprep.subr.mxu0 0.0
      %221 = vmatpush1.xpose.msra.mxu0 0.0
      %222 = vmatprep.subr.mxu0 0.0
      %223 = vmatpush1.xpose.msra.mxu0 0.0
      %224 = vmatprep.subr.mxu0 0.0
      %225 = vmatpush1.xpose.msra.mxu0 0.0
      %226 = vmatprep.subr.mxu0 0.0
      %227 = vmatpush1.xpose.msra.mxu0 0.0
      %228 = vmatprep.subr.mxu0 0.0
      %229 = vmatpush1.xpose.msra.mxu0 0.0
      %230 = vmatprep.subr.mxu0 0.0
      %231 = vmatpush1.xpose.msra.mxu0 0.0
      %232 = vmatprep.subr.mxu0 0.0
      %233 = vmatpush1.xpose.msra.mxu0 0.0
      %234 = vmatprep.subr.mxu0 0.0
      %235 = vmatpush1.xpose.msra.mxu0 0.0
      %236 = vmatprep.subr.mxu0 0.0
      %237 = vmatpush1.xpose.msra.mxu0 0.0
      %238 = vmatprep.subr.mxu0 0.0
      %239 = vmatpush1.xpose.msra.mxu0 0.0
      %240 = vmatprep.subr.mxu0 0.0
      %241 = vmatpush1.xpose.msra.mxu0 0.0
      %242 = vmatprep.subr.mxu0 0.0
      %243 = vmatpush1.xpose.msra.mxu0 0.0
      %244 = vmatprep.subr.mxu0 0.0
      %245 = vmatpush1.xpose.msra.mxu0 0.0
      %246 = vmatprep.subr.mxu0 0.0
      %247 = vmatpush1.xpose.msra.mxu0 0.0
      %248 = vmatprep.subr.mxu0 0.0
      %249 = vmatpush1.xpose.msra.mxu0 0.0
      %250 = vmatprep.subr.mxu0 0.0
      %251 = vmatpush1.xpose.msra.mxu0 0.0
      %252 = vmatprep.subr.mxu0 0.0
      %253 = vmatpush1.xpose.msra.mxu0 0.0
      %254 = vmatprep.subr.mxu0 0.0
      %255 = vmatpush1.xpose.msra.mxu0 0.0
      %256 = vmatprep.subr.mxu0 0.0
      %257 = vmatpush1.xpose.msra.mxu0 0.0
      %258 = vmatprep.subr.mxu0 0.0
      %259 = vmatpush1.xpose.msra.mxu0 0.0
      %260 = vmatprep.subr.mxu0 0.0
      %261 = vmatpush1.xpose.msra.mxu0 0.0
      %262 = vmatprep.subr.mxu0 0.0
      %263 = vmatpush1.xpose.msra.mxu0 0.0
      %264 = vmatprep.subr.mxu0 0.0
      %265 = vmatpush1.xpose.msra.mxu0 0.0
      %266 = vmatprep.subr.mxu0 0.0
      %267 = vmatpush1.xpose.msra.mxu0 0.0
      %268 = vmatprep.mubr.f32.mxu0 %v192
      %269 = vmatmul.mubr.f32.gmra.mrb[0].mxu0 %v189
      %v270 = vpop.f32.mrb[0].mxu0
      %v271 = vadd.f32 0.0, %v270
      %v272 = vpop.f32.mrb[0].mxu0
      %273 = vdwg.mxu0
      %v274 = vadd.f32 %v203, %v271
      %vm275 = vcmask 27648
      %276 = vst.msk [vmem:[%s180] sm:$0xf] %vm275, %v274
      %p277 = scmp.lt.s32.totalorder %s18, 1
      %s278 = scalar_select %p277, %s18, 1
      %s279 = smul.addr %s278, 4
      %s280 = scalar_lea.vmem %s1, %s279
      %p281 = scmp.lt.s32.totalorder %s18, 1
      %s282 = scalar_select %p281, %s18, 1
      %s283 = smul.addr %s282, 4
      %s284 = scalar_lea.vmem %s2, %s283
      // Predicated region
      $region29: #{channel_grouping_forward.2} parent=23 // pred_check
        %p285 = pneg %p72
      $region30: #{channel_grouping_forward.2} parent=23 // pred_check_branch
        %287 = sbr.rel (%p285) target = $region32
      $region31: #{channel_grouping_forward.2} parent=23 // pred_region
        _
      $region32: #{channel_grouping_forward.2} parent=23 // pred_fallthru
        _
      // Predicated region
      $region33: #{channel_grouping_forward.2} parent=23 // pred_check
        %p288 = pneg %p98
      $region34: #{channel_grouping_forward.2} parent=23 // pred_check_branch
        %290 = sbr.rel (%p288) target = $region36
      $region35: #{channel_grouping_forward.2} parent=23 // pred_region
        _
      $region36: #{channel_grouping_forward.2} parent=23 // pred_fallthru
        _
    $region24: #{channel_grouping_forward.2} parent=5 // pred_fallthru
      _
    %p291 = scmp.le.s32.totalorder 2, %s9
    // Predicated region
    $region37: #{channel_grouping_forward.2} parent=5 // pred_check
      %p292 = pneg %p291
    $region38: #{channel_grouping_forward.2} parent=5 // pred_check_branch
      %294 = sbr.rel (%p292) target = $region40
    $region39: #{channel_grouping_forward.2} parent=5 // pred_region
      %s295 = ssub.s32 %s9, 2
      // Predicated region
      $region41: #{channel_grouping_forward.2} parent=39 // pred_check
        %p296 = pneg %p78
      $region42: #{channel_grouping_forward.2} parent=39 // pred_check_branch
        %298 = sbr.rel (%p296) target = $region44
      $region43: #{channel_grouping_forward.2} parent=39 // pred_region
        %p299 = scmp.lt.s32.totalorder %s20, 1
        %s300 = scalar_select %p299, %s20, 1
        %s301 = smul.addr %s300, 4
        %s302 = scalar_lea.vmem %s1, %s301
      $region44: #{channel_grouping_forward.2} parent=39 // pred_fallthru
        _
      // Predicated region
      $region45: #{channel_grouping_forward.2} parent=39 // pred_check
        %p303 = pneg %p104
      $region46: #{channel_grouping_forward.2} parent=39 // pred_check_branch
        %305 = sbr.rel (%p303) target = $region48
      $region47: #{channel_grouping_forward.2} parent=39 // pred_region
        %p306 = scmp.lt.s32.totalorder %s20, 1
        %s307 = scalar_select %p306, %s20, 1
        %s308 = smul.addr %s307, 4
        %s309 = scalar_lea.vmem %s2, %s308
      $region48: #{channel_grouping_forward.2} parent=39 // pred_fallthru
        _
    $region40: #{channel_grouping_forward.2} parent=5 // pred_fallthru
      _
  $region6: #{channel_grouping_forward.2} parent=0 // loop_footer
    %s13 = sadd.s32 1, %s9
  $region7: #{channel_grouping_forward.2} parent=0 // loop_footer_branch
    %8 = sbr.rel target = $region3
  $region8: #{channel_grouping_forward.2} parent=0 // loop_exit
    _

// kernel: channel_grouping_forward.3
$region0: #{channel_grouping_forward.3}
  #allocation0 [shape = 'u32[]', space=smem, size = 0x4, offset = 0x4, fixed_abs, tag = 'smem constant byte address 0x4 - core index']
  #allocation1 [shape = 'u32[144,128]{1,0:T(1,128)}', space=vmem, size = 0x12000, scoped, tag = 'internal scratch']
  %s0 = inlined_call_operand.vmem [shape: f32[2,4,256], index: 0, kind: input, shape index: {}]
  %s1 = inlined_call_operand.vmem [shape: f32[8,4], index: 1, kind: input, shape index: {}]
  %s2 = inlined_call_operand.vmem [shape: f32[8,1], index: 2, kind: input, shape index: {}]
  %s3 = inlined_call_operand.vmem [shape: f32[8,1], index: 3, kind: input, shape index: {}]
  %s4 = inlined_call_operand.vmem [shape: f32[2,8,256], index: 4, kind: output, shape index: {0}]
  %s5 = inlined_call_operand.vmem [shape: f32[2,8,8], index: 5, kind: output, shape index: {1}]
  %6 = xla_tuple %s4, %s5
  %s7 = sld [smem:[#allocation0]]
  $region61: #{channel_grouping_forward.3} parent=0
    _
  %s9 = ssub.s32 1, %s7
  %s10 = scalar_select 0, %s9, %s7
  loop: start=0, step=1, limit=4
  $region2: #{channel_grouping_forward.3} parent=0 // loop_pre_header
    _
  $region3: #{channel_grouping_forward.3} parent=0 // loop_header
    %s12 = sphi 0, %s16
    %p13 = scmp.ge.s32.totalorder %s12, 4
    %s19 = sphi 0, %s31
    %s20 = sphi 0, %s27
    %s21 = sphi 0, %s19
    %s22 = sphi 0, %s20
    %s23 = sphi 0, %s21
    %s24 = sphi 0, %s22
    %s36 = sphi 0, %s38
    %s39 = sphi 0, %s36
    %s40 = sphi 0, %s39
    %s56 = sphi 0, %s40
    %s60 = sphi 0, %s60
    %s62 = sphi 0, %s60
    %s63 = sphi 0, %s62
    %s77 = sphi 0, %s63
    %s81 = sphi 0, %s81
    %s83 = sphi 0, %s81
    %s84 = sphi 0, %s83
    %s98 = sphi 0, %s84
    %s102 = sphi 0, %s102
    %s104 = sphi 0, %s102
    %s105 = sphi 0, %s104
    %s119 = sphi 0, %s105
    %s127 = sphi 0, %s129
    %s130 = sphi 0, %s127
    %s131 = sphi 0, %s130
    %s147 = sphi 0, %s131
    %s153 = sphi 0, %s155
    %s156 = sphi 0, %s153
    %s157 = sphi 0, %s156
    %s173 = sphi 0, %s157
  $region4: #{channel_grouping_forward.3} parent=0 // loop_header_branch
    %15 = sbr.rel (%p13) target = $region8
  $region5: #{channel_grouping_forward.3} parent=0 // loop_body
    %s17 = ssub.s32 %s12, 1
    %s18 = ssub.s32 %s12, 2
    %s25 = sadd.s32 1, %s20
    %p26 = scmp.ge.s32.totalorder %s25, 1
    %s27 = scalar_select %p26, 0, %s25
    %s28 = sadd.s32 1, %s19
    %s29 = scalar_select %p26, %s28, %s19
    %p30 = scmp.ge.s32.totalorder %s29, 2
    %s31 = scalar_select %p30, 0, %s29
    %s32 = ssub.s32 %s19, %s31
    %s33 = ssub.s32 %s20, %s27
    %s34 = sor.u32 %s32, %s33
    %p35 = scmp.eq.s32.totalorder %s34, 0
    %s37 = sadd.s32 %s36, 1
    %s38 = scalar_select %p35, %s36, %s37
    %p41 = pneg %p35
    %p42 = scmp.eq.s32.totalorder %s12, 1
    %p43 = por %p41, %p42
    %p44 = scmp.ne.s32.totalorder %s36, %s39
    %p45 = scmp.eq.s32.totalorder %s12, 0
    %p46 = por %p44, %p45
    %p47 = scmp.ne.s32.totalorder %s36, %s39
    %p48 = scmp.eq.s32.totalorder %s17, 1
    %p49 = por %p47, %p48
    %p50 = scmp.ne.s32.totalorder %s39, %s40
    %p51 = scmp.eq.s32.totalorder %s17, 0
    %p52 = por %p50, %p51
    %p53 = scmp.ne.s32.totalorder %s39, %s40
    %p54 = scmp.eq.s32.totalorder %s18, 1
    %p55 = por %p53, %p54
    %p57 = scmp.ne.s32.totalorder %s40, %s56
    %p58 = scmp.eq.s32.totalorder %s18, 0
    %p59 = por %p57, %p58
    %s61 = sadd.s32 %s60, 1
    %p64 = scmp.eq.s32.totalorder %s12, 1
    %p65 = scmp.ne.s32.totalorder %s60, %s62
    %p66 = scmp.eq.s32.totalorder %s12, 0
    %p67 = por %p65, %p66
    %p68 = scmp.ne.s32.totalorder %s60, %s62
    %p69 = scmp.eq.s32.totalorder %s17, 1
    %p70 = por %p68, %p69
    %p71 = scmp.ne.s32.totalorder %s62, %s63
    %p72 = scmp.eq.s32.totalorder %s17, 0
    %p73 = por %p71, %p72
    %p74 = scmp.ne.s32.totalorder %s62, %s63
    %p75 = scmp.eq.s32.totalorder %s18, 1
    %p76 = por %p74, %p75
    %p78 = scmp.ne.s32.totalorder %s63, %s77
    %p79 = scmp.eq.s32.totalorder %s18, 0
    %p80 = por %p78, %p79
    %s82 = sadd.s32 %s81, 1
    %p85 = scmp.eq.s32.totalorder %s12, 1
    %p86 = scmp.ne.s32.totalorder %s81, %s83
    %p87 = scmp.eq.s32.totalorder %s12, 0
    %p88 = por %p86, %p87
    %p89 = scmp.ne.s32.totalorder %s81, %s83
    %p90 = scmp.eq.s32.totalorder %s17, 1
    %p91 = por %p89, %p90
    %p92 = scmp.ne.s32.totalorder %s83, %s84
    %p93 = scmp.eq.s32.totalorder %s17, 0
    %p94 = por %p92, %p93
    %p95 = scmp.ne.s32.totalorder %s83, %s84
    %p96 = scmp.eq.s32.totalorder %s18, 1
    %p97 = por %p95, %p96
    %p99 = scmp.ne.s32.totalorder %s84, %s98
    %p100 = scmp.eq.s32.totalorder %s18, 0
    %p101 = por %p99, %p100
    %s103 = sadd.s32 %s102, 1
    %p106 = scmp.eq.s32.totalorder %s12, 1
    %p107 = scmp.ne.s32.totalorder %s102, %s104
    %p108 = scmp.eq.s32.totalorder %s12, 0
    %p109 = por %p107, %p108
    %p110 = scmp.ne.s32.totalorder %s102, %s104
    %p111 = scmp.eq.s32.totalorder %s17, 1
    %p112 = por %p110, %p111
    %p113 = scmp.ne.s32.totalorder %s104, %s105
    %p114 = scmp.eq.s32.totalorder %s17, 0
    %p115 = por %p113, %p114
    %p116 = scmp.ne.s32.totalorder %s104, %s105
    %p117 = scmp.eq.s32.totalorder %s18, 1
    %p118 = por %p116, %p117
    %p120 = scmp.ne.s32.totalorder %s105, %s119
    %p121 = scmp.eq.s32.totalorder %s18, 0
    %p122 = por %p120, %p121
    %s123 = ssub.s32 %s19, %s31
    %s124 = ssub.s32 %s20, %s27
    %s125 = sor.u32 %s123, %s124
    %p126 = scmp.eq.s32.totalorder %s125, 0
    %s128 = sadd.s32 %s127, 1
    %s129 = scalar_select %p126, %s127, %s128
    %p132 = pneg %p126
    %p133 = scmp.eq.s32.totalorder %s12, 1
    %p134 = por %p132, %p133
    %p135 = scmp.ne.s32.totalorder %s127, %s130
    %p136 = scmp.eq.s32.totalorder %s12, 0
    %p137 = por %p135, %p136
    %p138 = scmp.ne.s32.totalorder %s127, %s130
    %p139 = scmp.eq.s32.totalorder %s17, 1
    %p140 = por %p138, %p139
    %p141 = scmp.ne.s32.totalorder %s130, %s131
    %p142 = scmp.eq.s32.totalorder %s17, 0
    %p143 = por %p141, %p142
    %p144 = scmp.ne.s32.totalorder %s130, %s131
    %p145 = scmp.eq.s32.totalorder %s18, 1
    %p146 = por %p144, %p145
    %p148 = scmp.ne.s32.totalorder %s131, %s147
    %p149 = scmp.eq.s32.totalorder %s18, 0
    %p150 = por %p148, %p149
    %s151 = ssub.s32 %s19, %s31
    %p152 = scmp.eq.s32.totalorder %s151, 0
    %s154 = sadd.s32 %s153, 1
    %s155 = scalar_select %p152, %s153, %s154
    %p158 = pneg %p152
    %p159 = scmp.eq.s32.totalorder %s12, 1
    %p160 = por %p158, %p159
    %p161 = scmp.ne.s32.totalorder %s153, %s156
    %p162 = scmp.eq.s32.totalorder %s12, 0
    %p163 = por %p161, %p162
    %p164 = scmp.ne.s32.totalorder %s153, %s156
    %p165 = scmp.eq.s32.totalorder %s17, 1
    %p166 = por %p164, %p165
    %p167 = scmp.ne.s32.totalorder %s156, %s157
    %p168 = scmp.eq.s32.totalorder %s17, 0
    %p169 = por %p167, %p168
    %p170 = scmp.ne.s32.totalorder %s156, %s157
    %p171 = scmp.eq.s32.totalorder %s18, 1
    %p172 = por %p170, %p171
    %p174 = scmp.ne.s32.totalorder %s157, %s173
    %p175 = scmp.eq.s32.totalorder %s18, 0
    %p176 = por %p174, %p175
    %p177 = scmp.le.s32.totalorder 1, %s12
    %p178 = scmp.lt.s32.totalorder %s12, 3
    %p179 = pnand %p177, %p178
    %p180 = pneg %p179
    // Predicated region
    $region9: #{channel_grouping_forward.3} parent=5 // pred_check
      _
    $region10: #{channel_grouping_forward.3} parent=5 // pred_check_branch
      %182 = sbr.rel (%p179) target = $region12
    $region11: #{channel_grouping_forward.3} parent=5 // pred_region
      %s183 = ssub.s32 %s12, 1
      // Predicated region
      $region13: #{channel_grouping_forward.3} parent=11 // pred_check
        %p184 = pneg %p73
      $region14: #{channel_grouping_forward.3} parent=11 // pred_check_branch
        %186 = sbr.rel (%p184) target = $region16
      $region15: #{channel_grouping_forward.3} parent=11 // pred_region
        _
      $region16: #{channel_grouping_forward.3} parent=11 // pred_fallthru
        _
      // Predicated region
      $region17: #{channel_grouping_forward.3} parent=11 // pred_check
        %p187 = pneg %p94
      $region18: #{channel_grouping_forward.3} parent=11 // pred_check_branch
        %189 = sbr.rel (%p187) target = $region20
      $region19: #{channel_grouping_forward.3} parent=11 // pred_region
        _
      $region20: #{channel_grouping_forward.3} parent=11 // pred_fallthru
        _
      // Predicated region
      $region21: #{channel_grouping_forward.3} parent=11 // pred_check
        %p190 = pneg %p115
      $region22: #{channel_grouping_forward.3} parent=11 // pred_check_branch
        %192 = sbr.rel (%p190) target = $region24
      $region23: #{channel_grouping_forward.3} parent=11 // pred_region
        _
      $region24: #{channel_grouping_forward.3} parent=11 // pred_fallthru
        _
    $region12: #{channel_grouping_forward.3} parent=5 // pred_fallthru
      _
    %p193 = scmp.lt.s32.totalorder %s12, 2
    // Predicated region
    $region25: #{channel_grouping_forward.3} parent=5 // pred_check
      %p194 = pneg %p193
    $region26: #{channel_grouping_forward.3} parent=5 // pred_check_branch
      %196 = sbr.rel (%p194) target = $region28
    $region27: #{channel_grouping_forward.3} parent=5 // pred_region
      // Predicated region
      $region29: #{channel_grouping_forward.3} parent=27 // pred_check
        %p197 = pneg %p46
      $region30: #{channel_grouping_forward.3} parent=27 // pred_check_branch
        %199 = sbr.rel (%p197) target = $region32
      $region31: #{channel_grouping_forward.3} parent=27 // pred_region
        %s200 = smul.u32 2, %s20
        %p201 = scmp.lt.s32.totalorder %s19, 1
        %s202 = scalar_select %p201, %s19, 1
        %p203 = scmp.lt.s32.totalorder %s200, 1
        %s204 = scalar_select %p203, %s200, 1
        %s205 = smul.addr %s202, 2
        %s206 = sadd.s32 %s204, %s205
        %s207 = smul.addr %s206, 4
        %s208 = scalar_lea.vmem %s0, %s207
        %s209 = smul.u32 2, %s20
      $region32: #{channel_grouping_forward.3} parent=27 // pred_fallthru
        _
    $region28: #{channel_grouping_forward.3} parent=5 // pred_fallthru
      _
    %p210 = scmp.le.s32.totalorder 1, %s12
    %p211 = scmp.lt.s32.totalorder %s12, 3
    %p212 = pnand %p210, %p211
    %p213 = pneg %p212
    // Predicated region
    $region33: #{channel_grouping_forward.3} parent=5 // pred_check
      _
    $region34: #{channel_grouping_forward.3} parent=5 // pred_check_branch
      %215 = sbr.rel (%p212) target = $region36
    $region35: #{channel_grouping_forward.3} parent=5 // pred_region
      %s216 = ssub.s32 %s12, 1
      %s217 = smul.u32 2, %s22
      %p218 = scmp.lt.s32.totalorder %s21, 1
      %s219 = scalar_select %p218, %s21, 1
      %p220 = scmp.lt.s32.totalorder %s217, 1
      %s221 = scalar_select %p220, %s217, 1
      %s222 = smul.addr %s219, 2
      %s223 = sadd.s32 %s221, %s222
      %s224 = smul.addr %s223, 4
      %s225 = scalar_lea.vmem %s0, %s224
      %p226 = pneg %p52
      %p227 = pneg %p49
      %p228 = pneg %p73
      %p229 = pneg %p70
      %p230 = pneg %p94
      %p231 = pneg %p91
      %p232 = pneg %p115
      %p233 = pneg %p112
      %p234 = pneg %p143
      %p235 = pneg %p140
      %s236 = smul.u32 2, %s22
      %p237 = scmp.lt.s32.totalorder %s21, 1
      %s238 = scalar_select %p237, %s21, 1
      %p239 = scmp.lt.s32.totalorder %s236, 1
      %s240 = scalar_select %p239, %s236, 1
      %s241 = smul.addr %s238, 2
      %s242 = sadd.s32 %s240, %s241
      %s243 = smul.addr %s242, 8
      %s244 = scalar_lea.vmem %s4, %s243
      %p245 = pneg %p169
      %p246 = pneg %p166
      %p247 = scmp.lt.s32.totalorder %s21, 1
      %s248 = scalar_select %p247, %s21, 1
      %s249 = smul.addr %s248, 8
      %s250 = scalar_lea.vmem %s5, %s249
      %s251 = smul.u32 2, %s22
      %p252 = scmp.lt.s32.totalorder %s21, 1
      %s253 = scalar_select %p252, %s21, 1
      %p254 = scmp.lt.s32.totalorder %s251, 1
      %s255 = scalar_select %p254, %s251, 1
      %s256 = smul.addr %s253, 2
      %s257 = sadd.s32 %s255, %s256
      %s258 = smul.addr %s257, 4
      %s259 = scalar_lea.vmem %s0, %s258
      %s260 = smul.u32 2, %s22
      %s261 = smul.u32 2, %s22
      %p262 = scmp.lt.s32.totalorder %s21, 1
      %s263 = scalar_select %p262, %s21, 1
      %p264 = scmp.lt.s32.totalorder %s261, 1
      %s265 = scalar_select %p264, %s261, 1
      %s266 = smul.addr %s263, 2
      %s267 = sadd.s32 %s265, %s266
      %s268 = smul.addr %s267, 8
      %s269 = scalar_lea.vmem %s4, %s268
      %s270 = smul.u32 2, %s22
      %p271 = scmp.lt.s32.totalorder %s21, 1
      %s272 = scalar_select %p271, %s21, 1
      %s273 = smul.addr %s272, 8
      %s274 = scalar_lea.vmem %s5, %s273
      %v275 = vld [vmem:[%s1] sm:$0xff]
      %v276 = vld [vmem:[%s259] sm:$0xff]
      %v278 = vcombine.high %v276, %v276
      %vm279 = vcmask 31744
      %v281 = vsel %vm279, %v275, 0
      %vm283 = vcmask 1043456
      %v284 = vsel %vm283, %v276, 0
      %v286 = vsel %vm283, %v278, 0
      %288 = vmatprep.subr.mxu0 %v286
      %289 = vmatpush1.msra.mxu0 %v284
      %290 = vmatprep.subr.mxu0 0.0
      %291 = vmatpush1.msra.mxu0 0.0
      %292 = vmatprep.subr.mxu0 0.0
      %293 = vmatpush1.msra.mxu0 0.0
      %294 = vmatprep.subr.mxu0 0.0
      %295 = vmatpush1.msra.mxu0 0.0
      %296 = vmatprep.subr.mxu0 0.0
      %297 = vmatpush1.msra.mxu0 0.0
      %298 = vmatprep.subr.mxu0 0.0
      %299 = vmatpush1.msra.mxu0 0.0
      %300 = vmatprep.subr.mxu0 0.0
      %301 = vmatpush1.msra.mxu0 0.0
      %302 = vmatprep.subr.mxu0 0.0
      %303 = vmatpush1.msra.mxu0 0.0
      %304 = vmatprep.subr.mxu0 0.0
      %305 = vmatpush1.msra.mxu0 0.0
      %306 = vmatprep.subr.mxu0 0.0
      %307 = vmatpush1.msra.mxu0 0.0
      %308 = vmatprep.subr.mxu0 0.0
      %309 = vmatpush1.msra.mxu0 0.0
      %310 = vmatprep.subr.mxu0 0.0
      %311 = vmatpush1.msra.mxu0 0.0
      %312 = vmatprep.subr.mxu0 0.0
      %313 = vmatpush1.msra.mxu0 0.0
      %314 = vmatprep.subr.mxu0 0.0
      %315 = vmatpush1.msra.mxu0 0.0
      %316 = vmatprep.subr.mxu0 0.0
      %317 = vmatpush1.msra.mxu0 0.0
      %318 = vmatprep.subr.mxu0 0.0
      %319 = vmatpush1.msra.mxu0 0.0
      %320 = vmatprep.subr.mxu0 0.0
      %321 = vmatpush1.msra.mxu0 0.0
      %322 = vmatprep.subr.mxu0 0.0
      %323 = vmatpush1.msra.mxu0 0.0
      %324 = vmatprep.subr.mxu0 0.0
      %325 = vmatpush1.msra.mxu0 0.0
      %326 = vmatprep.subr.mxu0 0.0
      %327 = vmatpush1.msra.mxu0 0.0
      %328 = vmatprep.subr.mxu0 0.0
      %329 = vmatpush1.msra.mxu0 0.0
      %330 = vmatprep.subr.mxu0 0.0
      %331 = vmatpush1.msra.mxu0 0.0
      %332 = vmatprep.subr.mxu0 0.0
      %333 = vmatpush1.msra.mxu0 0.0
      %334 = vmatprep.subr.mxu0 0.0
      %335 = vmatpush1.msra.mxu0 0.0
      %336 = vmatprep.subr.mxu0 0.0
      %337 = vmatpush1.msra.mxu0 0.0
      %338 = vmatprep.subr.mxu0 0.0
      %339 = vmatpush1.msra.mxu0 0.0
      %340 = vmatprep.subr.mxu0 0.0
      %341 = vmatpush1.msra.mxu0 0.0
      %342 = vmatprep.subr.mxu0 0.0
      %343 = vmatpush1.msra.mxu0 0.0
      %344 = vmatprep.subr.mxu0 0.0
      %345 = vmatpush1.msra.mxu0 0.0
      %346 = vmatprep.subr.mxu0 0.0
      %347 = vmatpush1.msra.mxu0 0.0
      %348 = vmatprep.subr.mxu0 0.0
      %349 = vmatpush1.msra.mxu0 0.0
      %350 = vmatprep.subr.mxu0 0.0
      %351 = vmatpush1.msra.mxu0 0.0
      %352 = vmatprep.mubr.f32.mxu0 0.0
      %353 = vmatmul.mubr.f32.gmra.mrb[0].mxu0 %v281
      %v354 = vpop.f32.mrb[0].mxu0
      %v355 = vadd.f32 0.0, %v354
      %v356 = vpop.f32.mrb[0].mxu0
      %v357 = vadd.f32 0.0, %v356
      %358 = vdwg.mxu0
      %v359 = vld [vmem:[%s2] sm:$0xff]
      %361 = vset.pattern.permute.xlu0 0
      %362 = vperm.xlu0 %361, %v359
      %v363 = vpop.permute.xlu0 %362
      %v365 = vsub.f32 %v355, %v363
      %v366 = vsub.f32 %v357, %v363
      %v367 = vld [vmem:[%s3] sm:$0xff]
      %369 = vset.pattern.permute.xlu0 0
      %370 = vperm.xlu0 %369, %v367
      %v371 = vpop.permute.xlu0 %370
      %v373 = vmul.f32 %v365, %v371
      %v374 = vmul.f32 %v366, %v371
      %v375 = vmax.f32 %v373, 0.0
      %v376 = vmax.f32 %v374, 0.0
      %377 = vst [vmem:[%s269] sm:$0xff] %v375
      %378 = vst [vmem:[%s269 + $0x8] sm:$0xff] %v376
      %v379 = vadd.f32 %v375, 0.001
      %v380 = vadd.f32 %v376, 0.001
      %p381 = scmp.eq.s32.totalorder %s22, 0
      // Predicated region
      $region37: #{channel_grouping_forward.3} parent=35 // pred_check
        %p382 = pneg %p381
      $region38: #{channel_grouping_forward.3} parent=35 // pred_check_branch
        %384 = sbr.rel (%p382) target = $region40
      $region39: #{channel_grouping_forward.3} parent=35 // pred_region
        %vm385 = vcmask 64512
        %386 = vst.msk [vmem:[%s274] sm:$0xff] %vm385, 0.0
      $region40: #{channel_grouping_forward.3} parent=35 // pred_fallthru
        _
      %v387 = vld [vmem:[%s274] sm:$0xff]
      %388 = vmatprep.subr.mxu0 %v380
      %389 = vmatpush1.xpose.msra.mxu0 %v379
      %390 = vmatprep.subr.mxu0 0.0
      %391 = vmatpush1.xpose.msra.mxu0 0.0
      %392 = vmatprep.subr.mxu0 0.0
      %393 = vmatpush1.xpose.msra.mxu0 0.0
      %394 = vmatprep.subr.mxu0 0.0
      %395 = vmatpush1.xpose.msra.mxu0 0.0
      %396 = vmatprep.subr.mxu0 0.0
      %397 = vmatpush1.xpose.msra.mxu0 0.0
      %398 = vmatprep.subr.mxu0 0.0
      %399 = vmatpush1.xpose.msra.mxu0 0.0
      %400 = vmatprep.subr.mxu0 0.0
      %401 = vmatpush1.xpose.msra.mxu0 0.0
      %402 = vmatprep.subr.mxu0 0.0
      %403 = vmatpush1.xpose.msra.mxu0 0.0
      %404 = vmatprep.subr.mxu0 0.0
      %405 = vmatpush1.xpose.msra.mxu0 0.0
      %406 = vmatprep.subr.mxu0 0.0
      %407 = vmatpush1.xpose.msra.mxu0 0.0
      %408 = vmatprep.subr.mxu0 0.0
      %409 = vmatpush1.xpose.msra.mxu0 0.0
      %410 = vmatprep.subr.mxu0 0.0
      %411 = vmatpush1.xpose.msra.mxu0 0.0
      %412 = vmatprep.subr.mxu0 0.0
      %413 = vmatpush1.xpose.msra.mxu0 0.0
      %414 = vmatprep.subr.mxu0 0.0
      %415 = vmatpush1.xpose.msra.mxu0 0.0
      %416 = vmatprep.subr.mxu0 0.0
      %417 = vmatpush1.xpose.msra.mxu0 0.0
      %418 = vmatprep.subr.mxu0 0.0
      %419 = vmatpush1.xpose.msra.mxu0 0.0
      %420 = vmatprep.subr.mxu0 0.0
      %421 = vmatpush1.xpose.msra.mxu0 0.0
      %422 = vmatprep.subr.mxu0 0.0
      %423 = vmatpush1.xpose.msra.mxu0 0.0
      %424 = vmatprep.subr.mxu0 0.0
      %425 = vmatpush1.xpose.msra.mxu0 0.0
      %426 = vmatprep.subr.mxu0 0.0
      %427 = vmatpush1.xpose.msra.mxu0 0.0
      %428 = vmatprep.subr.mxu0 0.0
      %429 = vmatpush1.xpose.msra.mxu0 0.0
      %430 = vmatprep.subr.mxu0 0.0
      %431 = vmatpush1.xpose.msra.mxu0 0.0
      %432 = vmatprep.subr.mxu0 0.0
      %433 = vmatpush1.xpose.msra.mxu0 0.0
      %434 = vmatprep.subr.mxu0 0.0
      %435 = vmatpush1.xpose.msra.mxu0 0.0
      %436 = vmatprep.subr.mxu0 0.0
      %437 = vmatpush1.xpose.msra.mxu0 0.0
      %438 = vmatprep.subr.mxu0 0.0
      %439 = vmatpush1.xpose.msra.mxu0 0.0
      %440 = vmatprep.subr.mxu0 0.0
      %441 = vmatpush1.xpose.msra.mxu0 0.0
      %442 = vmatprep.subr.mxu0 0.0
      %443 = vmatpush1.xpose.msra.mxu0 0.0
      %444 = vmatprep.subr.mxu0 0.0
      %445 = vmatpush1.xpose.msra.mxu0 0.0
      %446 = vmatprep.subr.mxu0 0.0
      %447 = vmatpush1.xpose.msra.mxu0 0.0
      %448 = vmatprep.subr.mxu0 0.0
      %449 = vmatpush1.xpose.msra.mxu0 0.0
      %450 = vmatprep.subr.mxu0 0.0
      %451 = vmatpush1.xpose.msra.mxu0 0.0
      %452 = vmatprep.mubr.f32.mxu0 %v380
      %453 = vmatmul.mubr.f32.gmra.mrb[0].mxu0 %v379
      %v454 = vpop.f32.mrb[0].mxu0
      %v455 = vadd.f32 0.0, %v454
      %v456 = vpop.f32.mrb[0].mxu0
      %457 = vdwg.mxu0
      %v458 = vadd.f32 %v387, %v455
      %vm459 = vcmask 64512
      %460 = vst.msk [vmem:[%s274] sm:$0xff] %vm459, %v458
      %s461 = smul.u32 2, %s22
      %p462 = scmp.lt.s32.totalorder %s21, 1
      %s463 = scalar_select %p462, %s21, 1
      %p464 = scmp.lt.s32.totalorder %s461, 1
      %s465 = scalar_select %p464, %s461, 1
      %s466 = smul.addr %s463, 2
      %s467 = sadd.s32 %s465, %s466
      %s468 = smul.addr %s467, 8
      %s469 = scalar_lea.vmem %s4, %s468
      %p470 = scmp.lt.s32.totalorder %s21, 1
      %s471 = scalar_select %p470, %s21, 1
      %s472 = smul.addr %s471, 8
      %s473 = scalar_lea.vmem %s5, %s472
      // Predicated region
      $region41: #{channel_grouping_forward.3} parent=35 // pred_check
        %p474 = pneg %p140
      $region42: #{channel_grouping_forward.3} parent=35 // pred_check_branch
        %476 = sbr.rel (%p474) target = $region44
      $region43: #{channel_grouping_forward.3} parent=35 // pred_region
        %s477 = smul.u32 2, %s22
      $region44: #{channel_grouping_forward.3} parent=35 // pred_fallthru
        _
      // Predicated region
      $region45: #{channel_grouping_forward.3} parent=35 // pred_check
        %p478 = pneg %p166
      $region46: #{channel_grouping_forward.3} parent=35 // pred_check_branch
        %480 = sbr.rel (%p478) target = $region48
      $region47: #{channel_grouping_forward.3} parent=35 // pred_region
        _
      $region48: #{channel_grouping_forward.3} parent=35 // pred_fallthru
        _
    $region36: #{channel_grouping_forward.3} parent=5 // pred_fallthru
      _
    %p481 = scmp.le.s32.totalorder 2, %s12
    // Predicated region
    $region49: #{channel_grouping_forward.3} parent=5 // pred_check
      %p482 = pneg %p481
    $region50: #{channel_grouping_forward.3} parent=5 // pred_check_branch
      %484 = sbr.rel (%p482) target = $region52
    $region51: #{channel_grouping_forward.3} parent=5 // pred_region
      %s485 = ssub.s32 %s12, 2
      // Predicated region
      $region53: #{channel_grouping_forward.3} parent=51 // pred_check
        %p486 = pneg %p146
      $region54: #{channel_grouping_forward.3} parent=51 // pred_check_branch
        %488 = sbr.rel (%p486) target = $region56
      $region55: #{channel_grouping_forward.3} parent=51 // pred_region
        %s489 = smul.u32 2, %s24
        %p490 = scmp.lt.s32.totalorder %s23, 1
        %s491 = scalar_select %p490, %s23, 1
        %p492 = scmp.lt.s32.totalorder %s489, 1
        %s493 = scalar_select %p492, %s489, 1
        %s494 = smul.addr %s491, 2
        %s495 = sadd.s32 %s493, %s494
        %s496 = smul.addr %s495, 8
        %s497 = scalar_lea.vmem %s4, %s496
      $region56: #{channel_grouping_forward.3} parent=51 // pred_fallthru
        _
      // Predicated region
      $region57: #{channel_grouping_forward.3} parent=51 // pred_check
        %p498 = pneg %p172
      $region58: #{channel_grouping_forward.3} parent=51 // pred_check_branch
        %500 = sbr.rel (%p498) target = $region60
      $region59: #{channel_grouping_forward.3} parent=51 // pred_region
        %p501 = scmp.lt.s32.totalorder %s23, 1
        %s502 = scalar_select %p501, %s23, 1
        %s503 = smul.addr %s502, 8
        %s504 = scalar_lea.vmem %s5, %s503
      $region60: #{channel_grouping_forward.3} parent=51 // pred_fallthru
        _
    $region52: #{channel_grouping_forward.3} parent=5 // pred_fallthru
      _
  $region6: #{channel_grouping_forward.3} parent=0 // loop_footer
    %s16 = sadd.s32 1, %s12
  $region7: #{channel_grouping_forward.3} parent=0 // loop_footer_branch
    %11 = sbr.rel target = $region3
  $region8: #{channel_grouping_forward.3} parent=0 // loop_exit
    _

</llo_original>
